<compile_context>
chip_gen: v5e
topology: v5e:2x2
jax: 0.10.0
libtpu: 0.0.40
codegen_flags: <defaults>
</compile_context>

<pallas_src>
import functools
import math

import jax
import jax.numpy as jnp
from jax.experimental import pallas as pl
from jax.experimental.pallas import tpu as pltpu


def _round_up(n, m):
    return ((n + m - 1) // m) * m


def mine_kernel(x_ref, z_ref, zm_ref,
                w1x_ref, w1z_ref, b1_ref, w2_ref, b2_ref, w3_ref, b3_ref,
                sum_out_ref, m_out_ref, s_out_ref,
                sum_t_ref, m_ref, s_ref, *, batch, tiles_per_core):
    """Batch-tiled MINE forward: per-tile MLP pass + online mean / logsumexp."""
    c = pl.program_id(0)          # core-split axis ("parallel")
    j = pl.program_id(1)          # batch-tile axis ("arbitrary", reduction)
    tb = x_ref.shape[0]

    @pl.when(j == 0)
    def _init():
        sum_t_ref[...] = jnp.zeros_like(sum_t_ref)
        m_ref[...] = jnp.full_like(m_ref, -jnp.inf)
        s_ref[...] = jnp.zeros_like(s_ref)

    # Weights / biases (constant index maps, single-buffered).
    w1x = w1x_ref[...]
    w1z = w1z_ref[...]
    b1 = b1_ref[...]
    w2 = w2_ref[...]
    b2 = b2_ref[...]
    w3 = w3_ref[...]                  # (1, Hp) row vector, f32
    b3 = b3_ref[...]                  # (1, 1), f32
    cdt = w1x.dtype                   # MXU compute dtype (f32 or bf16)

    x = x_ref[...]                    # inputs are pre-cast to cdt by the wrapper
    z = z_ref[...]
    zm = zm_ref[...]

    # Layer 1: shared x-branch computed once (bias folded once); joint and
    # marginal z-branches as two small dots. No concatenates.
    xwb = jnp.dot(x, w1x, preferred_element_type=jnp.float32) + b1       # (tb, Hp)
    zw_j = jnp.dot(z, w1z, preferred_element_type=jnp.float32)           # (tb, Hp)
    zw_m = jnp.dot(zm, w1z, preferred_element_type=jnp.float32)          # (tb, Hp)
    h1_j = jnp.maximum(xwb + zw_j, 0.0)
    h1_m = jnp.maximum(xwb + zw_m, 0.0)

    # Layer 2 (f32 elementwise; cdt only feeds the MXU).
    h2_j = jnp.maximum(
        jnp.dot(h1_j.astype(cdt), w2, preferred_element_type=jnp.float32) + b2, 0.0)
    h2_m = jnp.maximum(
        jnp.dot(h1_m.astype(cdt), w2, preferred_element_type=jnp.float32) + b2, 0.0)

    # Valid-row mask for the zero-padded batch tail (global row index).
    rows = (c * tiles_per_core + j) * tb + jax.lax.broadcasted_iota(
        jnp.int32, (tb, 1), 0)
    valid = rows < batch
    n_valid = jnp.sum(valid.astype(jnp.float32))

    # Joint term: lane-dense sublane reduce over rows, then one lane reduce
    # against w3 (avoids the lane-sparse (tb,1) column path for this branch).
    h2j_sum = jnp.sum(jnp.where(valid, h2_j, 0.0), axis=0, keepdims=True)  # (1, Hp)
    sum_t_ref[...] += (jnp.sum(h2j_sum * w3, axis=-1, keepdims=True)
                       + n_valid * b3)

    # Marginal term: per-row scores (needed for logsumexp). Degenerate (Hp, 1)
    # matmul replaced by VPU multiply + lane reduce.
    t_marg = jnp.sum(h2_m * w3, axis=-1, keepdims=True) + b3               # (tb, 1)

    # Online logsumexp (running max m, running sum of exp(t_marg - m)).
    m_old = m_ref[...]
    m_tile = jnp.max(jnp.where(valid, t_marg, -jnp.inf), axis=0, keepdims=True)
    m_new = jnp.maximum(m_old, m_tile)
    # Guard the all-padding tile case (m_new == -inf): exp(-inf - -inf) is NaN.
    scale = jnp.where(m_new == -jnp.inf, 0.0, jnp.exp(m_old - m_new))
    p = jnp.where(valid, jnp.exp(t_marg - m_new), 0.0)
    s_ref[...] = s_ref[...] * scale + jnp.sum(p, axis=0, keepdims=True)
    m_ref[...] = m_new

    @pl.when(j == pl.num_programs(1) - 1)
    def _finalize():
        # Per-core partials; (1, 1, 128) blocks keep the stores lane-dense.
        sum_out_ref[...] = jnp.broadcast_to(sum_t_ref[...], (1, 1, 128))
        m_out_ref[...] = jnp.broadcast_to(m_ref[...], (1, 1, 128))
        s_out_ref[...] = jnp.broadcast_to(s_ref[...], (1, 1, 128))


def init_params(key, d_in, hidden):
    """Deterministic init mimicking torch.nn.Linear defaults (U(-1/sqrt(fan_in), ...))."""
    ks = jax.random.split(key, 6)

    def lin(kw, kb, fan_in, fan_out):
        bound = 1.0 / math.sqrt(fan_in)
        w = jax.random.uniform(kw, (fan_in, fan_out), jnp.float32, -bound, bound)
        b = jax.random.uniform(kb, (1, fan_out), jnp.float32, -bound, bound)
        return w, b

    w1, b1 = lin(ks[0], ks[1], d_in, hidden)
    w2, b2 = lin(ks[2], ks[3], hidden, hidden)
    w3, b3 = lin(ks[4], ks[5], hidden, 1)
    return (w1, b1, w2, b2, w3, b3)


def _prep_params(params, d_x, compute_dtype):
    """Split w1 into x/z branches and zero-pad the hidden dim to a lane-dense
    multiple of 128. Exact transformation: padded hidden units are dead
    (relu(0+0)=0 and their w2/w3 rows are zero)."""
    w1, b1, w2, b2, w3, b3 = params
    hidden = w1.shape[1]
    h_pad = _round_up(hidden, 128)
    ph = h_pad - hidden
    w1x = jnp.pad(w1[:d_x], ((0, 0), (0, ph))).astype(compute_dtype)
    w1z = jnp.pad(w1[d_x:], ((0, 0), (0, ph))).astype(compute_dtype)
    b1p = jnp.pad(b1, ((0, 0), (0, ph))).astype(jnp.float32)
    w2p = jnp.pad(w2, ((0, ph), (0, ph))).astype(compute_dtype)
    b2p = jnp.pad(b2, ((0, 0), (0, ph))).astype(jnp.float32)
    w3r = jnp.pad(w3.T, ((0, 0), (0, ph))).astype(jnp.float32)   # (1, Hp) row
    b3p = b3.astype(jnp.float32)                                 # (1, 1)
    return (w1x, w1z, b1p, w2p, b2p, w3r, b3p), h_pad


def _const_spec(shape):
    """Constant-index (weight) BlockSpec, single-buffered when supported."""
    try:
        return pl.BlockSpec(shape, lambda c, j: (0, 0), pipeline_mode=pl.Buffered(1))
    except TypeError:   # older jax without pipeline_mode on BlockSpec
        return pl.BlockSpec(shape, lambda c, j: (0, 0))


def mine_forward(x, z, params, z_marg=None, perm_key=None, *,
                 block_rows=1024, compute_dtype=jnp.float32, core_split=2):
    """Mine.forward for loss='mine' (forward value)."""
    # TODO(synk): running_mean EMA update only shapes the custom backward of
    # EMALoss; it does not change the returned loss, so it is not modeled here.
    x = x.astype(jnp.float32)
    z = z.astype(jnp.float32)
    B, d_x = x.shape
    d_z = z.shape[1]
    if z_marg is None:
        perm = jax.random.permutation(perm_key, B)   # stand-in for torch.randperm
        z_marg = z[perm]
    z_marg = z_marg.astype(jnp.float32)

    (w1x, w1z, b1, w2, b2, w3r, b3), h_pad = _prep_params(params, d_x, compute_dtype)

    # Cast activations in the wrapper: for bf16 this halves HBM->VMEM DMA bytes
    # and the double-buffered input footprint. Elementwise math stays f32 in-kernel.
    in_dtype = jnp.dtype(compute_dtype)
    x = x.astype(compute_dtype)
    z = z.astype(compute_dtype)
    z_marg = z_marg.astype(compute_dtype)
    in_itemsize = in_dtype.itemsize
    sub = 16 if in_itemsize < 4 else 8      # sublane packing for bf16

    # Batch tile derived from the padded hidden size: keep the live f32
    # intermediates (joint + marginal, ~8 tiles of (tb, Hp)) plus the
    # double-buffered activation tiles within ~12 MiB so the kernel fits
    # comfortably even in v7x's 64 MiB VMEM.
    inter_per_row = 8 * h_pad * 4
    act_per_row = 2 * (d_x + 2 * d_z) * in_itemsize
    tb_cap = max(sub, ((12 << 20) // (inter_per_row + act_per_row)) // sub * sub)
    tb = min(_round_up(int(block_rows), sub), tb_cap, _round_up(B, sub))

    num_tiles = -(-B // tb)
    # Dual-TensorCore split (v7x); on 1-TC chips the parallel axis just runs
    # sequentially with per-"core" partials combined below.
    num_cores = core_split if num_tiles >= core_split else 1
    tiles_per_core = -(-num_tiles // num_cores)
    b_padded = num_cores * tiles_per_core * tb
    if b_padded != B:
        pad = b_padded - B
        x = jnp.pad(x, ((0, pad), (0, 0)))
        z = jnp.pad(z, ((0, pad), (0, 0)))
        z_marg = jnp.pad(z_marg, ((0, pad), (0, 0)))

    kernel = functools.partial(mine_kernel, batch=B, tiles_per_core=tiles_per_core)

    wdt = jnp.dtype(compute_dtype).itemsize
    weight_bytes = ((d_x + d_z) * h_pad + h_pad * h_pad) * wdt + (3 * h_pad + 1) * 4
    vmem_need = (weight_bytes
                 + tb * act_per_row
                 + tb * inter_per_row
                 + (2 << 20))
    vmem_limit = int(min(48 << 20, max(vmem_need, 16 << 20)))

    flops = 2 * B * (h_pad * (d_x + 2 * d_z) + 2 * h_pad * h_pad + 2 * h_pad)
    bytes_accessed = int(in_itemsize * b_padded * (d_x + 2 * d_z)
                         + weight_bytes + 3 * num_cores * 128 * 4)

    row_map = lambda c, j: (c * tiles_per_core + j, 0)
    out_spec = pl.BlockSpec((1, 1, 128), lambda c, j: (c, 0, 0))

    grid_spec = pltpu.PrefetchScalarGridSpec(
        num_scalar_prefetch=0,
        grid=(num_cores, tiles_per_core),
        in_specs=[
            pl.BlockSpec((tb, d_x), row_map),        # x
            pl.BlockSpec((tb, d_z), row_map),        # z
            pl.BlockSpec((tb, d_z), row_map),        # z_marg
            _const_spec((d_x, h_pad)),               # w1_x
            _const_spec((d_z, h_pad)),               # w1_z
            _const_spec((1, h_pad)),                 # b1
            _const_spec((h_pad, h_pad)),             # w2
            _const_spec((1, h_pad)),                 # b2
            _const_spec((1, h_pad)),                 # w3 (row)
            _const_spec((1, 1)),                     # b3
        ],
        out_specs=[out_spec, out_spec, out_spec],
        scratch_shapes=[
            pltpu.VMEM((1, 1), jnp.float32),   # running sum of t_joint
            pltpu.VMEM((1, 1), jnp.float32),   # running max of t_marg
            pltpu.VMEM((1, 1), jnp.float32),   # running sum of exp(t_marg - m)
        ],
    )

    out_struct = jax.ShapeDtypeStruct((num_cores, 1, 128), jnp.float32)
    sum_parts, m_parts, s_parts = pl.pallas_call(
        kernel,
        out_shape=(out_struct, out_struct, out_struct),
        grid_spec=grid_spec,
        compiler_params=pltpu.CompilerParams(
            dimension_semantics=("parallel", "arbitrary"),
            vmem_limit_bytes=vmem_limit),
        cost_estimate=pl.CostEstimate(
            flops=flops, transcendentals=B + 8, bytes_accessed=bytes_accessed),
    )(x, z, z_marg, w1x, w1z, b1, w2, b2, w3r, b3)

    # Combine per-core partials (tiny, done in plain JAX).
    sum_t = jnp.sum(sum_parts[:, 0, 0])
    m = m_parts[:, 0, 0]
    s = s_parts[:, 0, 0]
    gm = jnp.max(m)                                   # finite: B >= 1
    s_tot = jnp.sum(jnp.where(m > -jnp.inf, s * jnp.exp(m - gm), 0.0))
    t_mean = sum_t / B
    second = gm + jnp.log(s_tot) - math.log(B)        # logsumexp(t_marg) - log(B)
    return second - t_mean


def mine_forward_ref(x, z, z_marg, params):
    """Pure-JAX reference for correctness checking."""
    w1, b1, w2, b2, w3, b3 = params

    def T(xz):
        h1 = jnp.maximum(xz @ w1 + b1, 0.0)
        h2 = jnp.maximum(h1 @ w2 + b2, 0.0)
        return h2 @ w3 + b3

    t = jnp.mean(T(jnp.concatenate([x, z], -1)))
    t_marg = T(jnp.concatenate([x, z_marg], -1))
    second = jax.scipy.special.logsumexp(t_marg, axis=0)[0] - math.log(x.shape[0])
    return -t + second


if __name__ == "__main__":
    key = jax.random.PRNGKey(0)

    # Case 1: small single-tile problem, f32 compute.
    B, Dx, Dz, H = 8, 16, 16, 32
    kx, kz, kp, kperm, kx2, kz2, kperm2 = jax.random.split(key, 7)
    x = jax.random.normal(kx, (B, Dx), jnp.float32)
    z = jax.random.normal(kz, (B, Dz), jnp.float32)
    params = init_params(kp, Dx + Dz, H)

    # Fix the permutation outside so kernel and reference see the same z_marg.
    perm = jax.random.permutation(kperm, B)
    z_marg = z[perm]

    loss = jax.block_until_ready(mine_forward(x, z, params, z_marg=z_marg))
    loss_ref = mine_forward_ref(x, z, z_marg, params)
    assert jnp.allclose(loss, loss_ref, atol=5e-3, rtol=5e-3), (loss, loss_ref)

    # Case 1b: bf16 compute path (f32 elementwise / accumulation), looser tolerance.
    loss_bf16 = jax.block_until_ready(
        mine_forward(x, z, params, z_marg=z_marg, compute_dtype=jnp.bfloat16))
    assert jnp.allclose(loss_bf16, loss_ref, atol=5e-2, rtol=5e-2), (loss_bf16, loss_ref)

    # Case 2: multi-tile, ragged batch with a 2-way core split
    # (exercises masking + online logsumexp + per-core partial merge).
    B2 = 100
    x2 = jax.random.normal(kx2, (B2, Dx), jnp.float32)
    z2 = jax.random.normal(kz2, (B2, Dz), jnp.float32)
    perm2 = jax.random.permutation(kperm2, B2)
    zm2 = z2[perm2]
    loss2 = jax.block_until_ready(
        mine_forward(x2, z2, params, z_marg=zm2, block_rows=32))
    loss2_ref = mine_forward_ref(x2, z2, zm2, params)
    assert jnp.allclose(loss2, loss2_ref, atol=5e-3, rtol=5e-3), (loss2, loss2_ref)

    # Case 3: odd tile count -> one core gets a fully-padded tile
    # (exercises the -inf / NaN guard in the online logsumexp).
    loss3 = jax.block_until_ready(
        mine_forward(x2, z2, params, z_marg=zm2, block_rows=48))
    assert jnp.allclose(loss3, loss2_ref, atol=5e-3, rtol=5e-3), (loss3, loss2_ref)

    print("KERNEL_OK")
</pallas_src>

<mosaic_0001>
module attributes {stable_mosaic.version = 11 : i64} {
  func.func @mine_kernel(%arg0: i32, %arg1: i32, %arg2: memref<8x16xf32, #tpu.memory_space<vmem>>, %arg3: memref<8x16xf32, #tpu.memory_space<vmem>>, %arg4: memref<8x16xf32, #tpu.memory_space<vmem>>, %arg5: memref<16x128xf32, #tpu.memory_space<vmem>>, %arg6: memref<16x128xf32, #tpu.memory_space<vmem>>, %arg7: memref<1x128xf32, #tpu.memory_space<vmem>>, %arg8: memref<128x128xf32, #tpu.memory_space<vmem>>, %arg9: memref<1x128xf32, #tpu.memory_space<vmem>>, %arg10: memref<1x128xf32, #tpu.memory_space<vmem>>, %arg11: memref<1x1xf32, #tpu.memory_space<vmem>>, %arg12: memref<1x1x128xf32, #tpu.memory_space<vmem>>, %arg13: memref<1x1x128xf32, #tpu.memory_space<vmem>>, %arg14: memref<1x1x128xf32, #tpu.memory_space<vmem>>, %arg15: memref<1x1xf32, #tpu.memory_space<vmem>>, %arg16: memref<1x1xf32, #tpu.memory_space<vmem>>, %arg17: memref<1x1xf32, #tpu.memory_space<vmem>>) attributes {dimension_semantics = [#tpu.dimension_semantics<parallel>, #tpu.dimension_semantics<arbitrary>], iteration_bounds = array<i64: 1, 1>, scalar_prefetch = 0 : i64, scratch_operands = 3 : i64, tpu.core_type = #tpu.core_type<tc>, window_params = [{transform_indices = @transform_0, window_bounds = array<i64: 8, 16>}, {transform_indices = @transform_1, window_bounds = array<i64: 8, 16>}, {transform_indices = @transform_2, window_bounds = array<i64: 8, 16>}, {pipeline_mode = #tpu.pipeline_mode<synchronous>, transform_indices = @transform_3, window_bounds = array<i64: 16, 128>}, {pipeline_mode = #tpu.pipeline_mode<synchronous>, transform_indices = @transform_4, window_bounds = array<i64: 16, 128>}, {pipeline_mode = #tpu.pipeline_mode<synchronous>, transform_indices = @transform_5, window_bounds = array<i64: 1, 128>}, {pipeline_mode = #tpu.pipeline_mode<synchronous>, transform_indices = @transform_6, window_bounds = array<i64: 128, 128>}, {pipeline_mode = #tpu.pipeline_mode<synchronous>, transform_indices = @transform_7, window_bounds = array<i64: 1, 128>}, {pipeline_mode = #tpu.pipeline_mode<synchronous>, transform_indices = @transform_8, window_bounds = array<i64: 1, 128>}, {pipeline_mode = #tpu.pipeline_mode<synchronous>, transform_indices = @transform_9, window_bounds = array<i64: 1, 1>}, {transform_indices = @transform_10, window_bounds = array<i64: 1, 1, 128>}, {transform_indices = @transform_11, window_bounds = array<i64: 1, 1, 128>}, {transform_indices = @transform_12, window_bounds = array<i64: 1, 1, 128>}]} {
    %c0_i32 = arith.constant 0 : i32
    %0 = arith.cmpi eq, %arg1, %c0_i32 : i32
    %1 = arith.extui %0 : i1 to i32
    %c0_i32_0 = arith.constant 0 : i32
    %2 = arith.cmpi ne, %1, %c0_i32_0 : i32
    scf.if %2 {
      %cst_54 = arith.constant 0.000000e+00 : f32
      %96 = vector.broadcast %cst_54 : f32 to vector<1x1xf32>
      %c0_55 = arith.constant 0 : index
      %c0_56 = arith.constant 0 : index
      %97 = vector.load %arg15[%c0_55, %c0_56] : memref<1x1xf32, #tpu.memory_space<vmem>>, vector<1x1xf32>
      tpu.vector_store %arg15[%c0_55, %c0_56], %96 {strides = array<i32>} : memref<1x1xf32, #tpu.memory_space<vmem>>, vector<1x1xf32>,
      %cst_57 = arith.constant 0xFF800000 : f32
      %98 = vector.broadcast %cst_57 : f32 to vector<1x1xf32>
      %c0_58 = arith.constant 0 : index
      %c0_59 = arith.constant 0 : index
      %99 = vector.load %arg16[%c0_58, %c0_59] : memref<1x1xf32, #tpu.memory_space<vmem>>, vector<1x1xf32>
      tpu.vector_store %arg16[%c0_58, %c0_59], %98 {strides = array<i32>} : memref<1x1xf32, #tpu.memory_space<vmem>>, vector<1x1xf32>,
      %cst_60 = arith.constant 0.000000e+00 : f32
      %100 = vector.broadcast %cst_60 : f32 to vector<1x1xf32>
      %c0_61 = arith.constant 0 : index
      %c0_62 = arith.constant 0 : index
      %101 = vector.load %arg17[%c0_61, %c0_62] : memref<1x1xf32, #tpu.memory_space<vmem>>, vector<1x1xf32>
      tpu.vector_store %arg17[%c0_61, %c0_62], %100 {strides = array<i32>} : memref<1x1xf32, #tpu.memory_space<vmem>>, vector<1x1xf32>,
    } else {
    }
    %c0 = arith.constant 0 : index
    %c0_1 = arith.constant 0 : index
    %3 = vector.load %arg5[%c0, %c0_1] : memref<16x128xf32, #tpu.memory_space<vmem>>, vector<16x128xf32>
    %c0_2 = arith.constant 0 : index
    %c0_3 = arith.constant 0 : index
    %4 = vector.load %arg6[%c0_2, %c0_3] : memref<16x128xf32, #tpu.memory_space<vmem>>, vector<16x128xf32>
    %c0_4 = arith.constant 0 : index
    %c0_5 = arith.constant 0 : index
    %5 = vector.load %arg7[%c0_4, %c0_5] : memref<1x128xf32, #tpu.memory_space<vmem>>, vector<1x128xf32>
    %c0_6 = arith.constant 0 : index
    %c0_7 = arith.constant 0 : index
    %6 = vector.load %arg8[%c0_6, %c0_7] : memref<128x128xf32, #tpu.memory_space<vmem>>, vector<128x128xf32>
    %c0_8 = arith.constant 0 : index
    %c0_9 = arith.constant 0 : index
    %7 = vector.load %arg9[%c0_8, %c0_9] : memref<1x128xf32, #tpu.memory_space<vmem>>, vector<1x128xf32>
    %c0_10 = arith.constant 0 : index
    %c0_11 = arith.constant 0 : index
    %8 = vector.load %arg10[%c0_10, %c0_11] : memref<1x128xf32, #tpu.memory_space<vmem>>, vector<1x128xf32>
    %c0_12 = arith.constant 0 : index
    %c0_13 = arith.constant 0 : index
    %9 = vector.load %arg11[%c0_12, %c0_13] : memref<1x1xf32, #tpu.memory_space<vmem>>, vector<1x1xf32>
    %c0_14 = arith.constant 0 : index
    %c0_15 = arith.constant 0 : index
    %10 = vector.load %arg2[%c0_14, %c0_15] : memref<8x16xf32, #tpu.memory_space<vmem>>, vector<8x16xf32>
    %c0_16 = arith.constant 0 : index
    %c0_17 = arith.constant 0 : index
    %11 = vector.load %arg3[%c0_16, %c0_17] : memref<8x16xf32, #tpu.memory_space<vmem>>, vector<8x16xf32>
    %c0_18 = arith.constant 0 : index
    %c0_19 = arith.constant 0 : index
    %12 = vector.load %arg4[%c0_18, %c0_19] : memref<8x16xf32, #tpu.memory_space<vmem>>, vector<8x16xf32>
    %cst = arith.constant dense<0.000000e+00> : vector<8x128xf32>
    %13 = tpu.matmul %10, %3, %cst {dimension_numbers = #tpu.dot_dimension_numbers<[1], [0], [0], [1], [0, 0, 1, 1], [], []>} : vector<8x16xf32>, vector<16x128xf32>, vector<8x128xf32> -> vector<8x128xf32>
    %14 = vector.broadcast %5 : vector<1x128xf32> to vector<8x128xf32>
    %15 = arith.addf %13, %14 : vector<8x128xf32>
    %cst_20 = arith.constant dense<0.000000e+00> : vector<8x128xf32>
    %16 = tpu.matmul %11, %4, %cst_20 {dimension_numbers = #tpu.dot_dimension_numbers<[1], [0], [0], [1], [0, 0, 1, 1], [], []>} : vector<8x16xf32>, vector<16x128xf32>, vector<8x128xf32> -> vector<8x128xf32>
    %cst_21 = arith.constant dense<0.000000e+00> : vector<8x128xf32>
    %17 = tpu.matmul %12, %4, %cst_21 {dimension_numbers = #tpu.dot_dimension_numbers<[1], [0], [0], [1], [0, 0, 1, 1], [], []>} : vector<8x16xf32>, vector<16x128xf32>, vector<8x128xf32> -> vector<8x128xf32>
    %18 = arith.addf %15, %16 : vector<8x128xf32>
    %cst_22 = arith.constant 0.000000e+00 : f32
    %19 = vector.broadcast %cst_22 : f32 to vector<8x128xf32>
    %20 = arith.maximumf %18, %19 : vector<8x128xf32>
    %21 = arith.addf %15, %17 : vector<8x128xf32>
    %cst_23 = arith.constant 0.000000e+00 : f32
    %22 = vector.broadcast %cst_23 : f32 to vector<8x128xf32>
    %23 = arith.maximumf %21, %22 : vector<8x128xf32>
    %cst_24 = arith.constant dense<0.000000e+00> : vector<8x128xf32>
    %24 = tpu.matmul %20, %6, %cst_24 {dimension_numbers = #tpu.dot_dimension_numbers<[1], [0], [0], [1], [0, 0, 1, 1], [], []>} : vector<8x128xf32>, vector<128x128xf32>, vector<8x128xf32> -> vector<8x128xf32>
    %25 = vector.broadcast %7 : vector<1x128xf32> to vector<8x128xf32>
    %26 = arith.addf %24, %25 : vector<8x128xf32>
    %cst_25 = arith.constant 0.000000e+00 : f32
    %27 = vector.broadcast %cst_25 : f32 to vector<8x128xf32>
    %28 = arith.maximumf %26, %27 : vector<8x128xf32>
    %cst_26 = arith.constant dense<0.000000e+00> : vector<8x128xf32>
    %29 = tpu.matmul %23, %6, %cst_26 {dimension_numbers = #tpu.dot_dimension_numbers<[1], [0], [0], [1], [0, 0, 1, 1], [], []>} : vector<8x128xf32>, vector<128x128xf32>, vector<8x128xf32> -> vector<8x128xf32>
    %30 = vector.broadcast %7 : vector<1x128xf32> to vector<8x128xf32>
    %31 = arith.addf %29, %30 : vector<8x128xf32>
    %cst_27 = arith.constant 0.000000e+00 : f32
    %32 = vector.broadcast %cst_27 : f32 to vector<8x128xf32>
    %33 = arith.maximumf %31, %32 : vector<8x128xf32>
    %c1_i32 = arith.constant 1 : i32
    %34 = arith.muli %arg0, %c1_i32 : i32
    %35 = arith.addi %34, %arg1 : i32
    %c8_i32 = arith.constant 8 : i32
    %36 = arith.muli %35, %c8_i32 : i32
    %37 = tpu.iota {dimensions = array<i32: 0>} : vector<8x1xi32>
    %38 = vector.broadcast %36 : i32 to vector<8x1xi32>
    %39 = arith.addi %38, %37 : vector<8x1xi32>
    %c8_i32_28 = arith.constant 8 : i32
    %40 = vector.broadcast %c8_i32_28 : i32 to vector<8x1xi32>
    %41 = arith.cmpi slt, %39, %40 : vector<8x1xi32>
    %42 = arith.extui %41 : vector<8x1xi1> to vector<8x1xi32>
    %43 = arith.sitofp %42 : vector<8x1xi32> to vector<8x1xf32>
    %44 = vector.shape_cast %43 : vector<8x1xf32> to vector<1x8x1xf32>
    %cst_29 = arith.constant dense<0.000000e+00> : vector<1xf32>
    %45 = vector.multi_reduction <add>, %44, %cst_29 [1, 2] : vector<1x8x1xf32> to vector<1xf32>
    %46 = vector.shape_cast %45 : vector<1xf32> to vector<1x1x1xf32>
    %47 = vector.extract %46[0, 0, 0] : f32 from vector<1x1x1xf32>
    %cst_30 = arith.constant 0.000000e+00 : f32
    %48 = vector.shape_cast %41 : vector<8x1xi1> to vector<8x1xi1>
    %49 = vector.broadcast %48 : vector<8x1xi1> to vector<8x128xi1>
    %50 = vector.broadcast %cst_30 : f32 to vector<8x128xf32>
    %51 = arith.select %49, %28, %50 : vector<8x128xi1>, vector<8x128xf32>
    %cst_31 = arith.constant dense<0.000000e+00> : vector<128xf32>
    %52 = vector.multi_reduction <add>, %51, %cst_31 [0] : vector<8x128xf32> to vector<128xf32>
    %53 = vector.shape_cast %52 : vector<128xf32> to vector<1x128xf32>
    %c0_32 = arith.constant 0 : index
    %c0_33 = arith.constant 0 : index
    %54 = vector.load %arg15[%c0_32, %c0_33] : memref<1x1xf32, #tpu.memory_space<vmem>>, vector<1x1xf32>
    %55 = arith.mulf %53, %8 : vector<1x128xf32>
    %cst_34 = arith.constant dense<0.000000e+00> : vector<1xf32>
    %56 = vector.multi_reduction <add>, %55, %cst_34 [1] : vector<1x128xf32> to vector<1xf32>
    %57 = vector.shape_cast %56 : vector<1xf32> to vector<1x1xf32>
    %58 = vector.broadcast %47 : f32 to vector<1x1xf32>
    %59 = arith.mulf %58, %9 : vector<1x1xf32>
    %60 = arith.addf %57, %59 : vector<1x1xf32>
    %61 = arith.addf %54, %60 : vector<1x1xf32>
    %c0_35 = arith.constant 0 : index
    %c0_36 = arith.constant 0 : index
    %62 = vector.load %arg15[%c0_35, %c0_36] : memref<1x1xf32, #tpu.memory_space<vmem>>, vector<1x1xf32>
    tpu.vector_store %arg15[%c0_35, %c0_36], %61 {strides = array<i32>} : memref<1x1xf32, #tpu.memory_space<vmem>>, vector<1x1xf32>,
    %63 = vector.broadcast %8 : vector<1x128xf32> to vector<8x128xf32>
    %64 = arith.mulf %33, %63 : vector<8x128xf32>
    %cst_37 = arith.constant dense<0.000000e+00> : vector<8xf32>
    %65 = vector.multi_reduction <add>, %64, %cst_37 [1] : vector<8x128xf32> to vector<8xf32>
    %66 = vector.shape_cast %65 : vector<8xf32> to vector<8x1xf32>
    %67 = vector.broadcast %9 : vector<1x1xf32> to vector<8x1xf32>
    %68 = arith.addf %66, %67 : vector<8x1xf32>
    %c0_38 = arith.constant 0 : index
    %c0_39 = arith.constant 0 : index
    %69 = vector.load %arg16[%c0_38, %c0_39] : memref<1x1xf32, #tpu.memory_space<vmem>>, vector<1x1xf32>
    %cst_40 = arith.constant 0xFF800000 : f32
    %70 = vector.broadcast %cst_40 : f32 to vector<8x1xf32>
    %71 = arith.select %41, %68, %70 : vector<8x1xi1>, vector<8x1xf32>
    %cst_41 = arith.constant dense<0xFF800000> : vector<1xf32>
    %72 = vector.multi_reduction <maximumf>, %71, %cst_41 [0] : vector<8x1xf32> to vector<1xf32>
    %73 = vector.shape_cast %72 : vector<1xf32> to vector<1x1xf32>
    %74 = arith.maximumf %69, %73 : vector<1x1xf32>
    %cst_42 = arith.constant 0xFF800000 : f32
    %75 = vector.broadcast %cst_42 : f32 to vector<1x1xf32>
    %76 = arith.cmpf oeq, %74, %75 : vector<1x1xf32>
    %77 = arith.subf %69, %74 : vector<1x1xf32>
    %78 = math.exp %77 : vector<1x1xf32>
    %cst_43 = arith.constant 0.000000e+00 : f32
    %79 = vector.broadcast %cst_43 : f32 to vector<1x1xf32>
    %80 = arith.select %76, %79, %78 : vector<1x1xi1>, vector<1x1xf32>
    %81 = vector.broadcast %74 : vector<1x1xf32> to vector<8x1xf32>
    %82 = arith.subf %68, %81 : vector<8x1xf32>
    %83 = math.exp %82 : vector<8x1xf32>
    %cst_44 = arith.constant 0.000000e+00 : f32
    %84 = vector.broadcast %cst_44 : f32 to vector<8x1xf32>
    %85 = arith.select %41, %83, %84 : vector<8x1xi1>, vector<8x1xf32>
    %c0_45 = arith.constant 0 : index
    %c0_46 = arith.constant 0 : index
    %86 = vector.load %arg17[%c0_45, %c0_46] : memref<1x1xf32, #tpu.memory_space<vmem>>, vector<1x1xf32>
    %87 = arith.mulf %86, %80 : vector<1x1xf32>
    %cst_47 = arith.constant dense<0.000000e+00> : vector<1xf32>
    %88 = vector.multi_reduction <add>, %85, %cst_47 [0] : vector<8x1xf32> to vector<1xf32>
    %89 = vector.shape_cast %88 : vector<1xf32> to vector<1x1xf32>
    %90 = arith.addf %87, %89 : vector<1x1xf32>
    %c0_48 = arith.constant 0 : index
    %c0_49 = arith.constant 0 : index
    %91 = vector.load %arg17[%c0_48, %c0_49] : memref<1x1xf32, #tpu.memory_space<vmem>>, vector<1x1xf32>
    tpu.vector_store %arg17[%c0_48, %c0_49], %90 {strides = array<i32>} : memref<1x1xf32, #tpu.memory_space<vmem>>, vector<1x1xf32>,
    %c0_50 = arith.constant 0 : index
    %c0_51 = arith.constant 0 : index
    %92 = vector.load %arg16[%c0_50, %c0_51] : memref<1x1xf32, #tpu.memory_space<vmem>>, vector<1x1xf32>
    tpu.vector_store %arg16[%c0_50, %c0_51], %74 {strides = array<i32>} : memref<1x1xf32, #tpu.memory_space<vmem>>, vector<1x1xf32>,
    %c0_i32_52 = arith.constant 0 : i32
    %93 = arith.cmpi eq, %arg1, %c0_i32_52 : i32
    %94 = arith.extui %93 : i1 to i32
    %c0_i32_53 = arith.constant 0 : i32
    %95 = arith.cmpi ne, %94, %c0_i32_53 : i32
    scf.if %95 {
      %c0_54 = arith.constant 0 : index
      %c0_55 = arith.constant 0 : index
      %96 = vector.load %arg15[%c0_54, %c0_55] : memref<1x1xf32, #tpu.memory_space<vmem>>, vector<1x1xf32>
      %97 = vector.shape_cast %96 : vector<1x1xf32> to vector<1x1x1xf32>
      %98 = vector.broadcast %97 : vector<1x1x1xf32> to vector<1x1x128xf32>
      %c0_56 = arith.constant 0 : index
      %c0_57 = arith.constant 0 : index
      %c0_58 = arith.constant 0 : index
      %99 = vector.load %arg12[%c0_56, %c0_57, %c0_58] : memref<1x1x128xf32, #tpu.memory_space<vmem>>, vector<1x1x128xf32>
      tpu.vector_store %arg12[%c0_56, %c0_57, %c0_58], %98 {strides = array<i32>} : memref<1x1x128xf32, #tpu.memory_space<vmem>>, vector<1x1x128xf32>,
      %c0_59 = arith.constant 0 : index
      %c0_60 = arith.constant 0 : index
      %100 = vector.load %arg16[%c0_59, %c0_60] : memref<1x1xf32, #tpu.memory_space<vmem>>, vector<1x1xf32>
      %101 = vector.shape_cast %100 : vector<1x1xf32> to vector<1x1x1xf32>
      %102 = vector.broadcast %101 : vector<1x1x1xf32> to vector<1x1x128xf32>
      %c0_61 = arith.constant 0 : index
      %c0_62 = arith.constant 0 : index
      %c0_63 = arith.constant 0 : index
      %103 = vector.load %arg13[%c0_61, %c0_62, %c0_63] : memref<1x1x128xf32, #tpu.memory_space<vmem>>, vector<1x1x128xf32>
      tpu.vector_store %arg13[%c0_61, %c0_62, %c0_63], %102 {strides = array<i32>} : memref<1x1x128xf32, #tpu.memory_space<vmem>>, vector<1x1x128xf32>,
      %c0_64 = arith.constant 0 : index
      %c0_65 = arith.constant 0 : index
      %104 = vector.load %arg17[%c0_64, %c0_65] : memref<1x1xf32, #tpu.memory_space<vmem>>, vector<1x1xf32>
      %105 = vector.shape_cast %104 : vector<1x1xf32> to vector<1x1x1xf32>
      %106 = vector.broadcast %105 : vector<1x1x1xf32> to vector<1x1x128xf32>
      %c0_66 = arith.constant 0 : index
      %c0_67 = arith.constant 0 : index
      %c0_68 = arith.constant 0 : index
      %107 = vector.load %arg14[%c0_66, %c0_67, %c0_68] : memref<1x1x128xf32, #tpu.memory_space<vmem>>, vector<1x1x128xf32>
      tpu.vector_store %arg14[%c0_66, %c0_67, %c0_68], %106 {strides = array<i32>} : memref<1x1x128xf32, #tpu.memory_space<vmem>>, vector<1x1x128xf32>,
    } else {
    }
    return
  }
  func.func @transform_0(%arg0: i32, %arg1: i32) -> (i32, i32) {
    %c1_i32 = arith.constant 1 : i32
    %0 = arith.muli %arg0, %c1_i32 : i32
    %1 = arith.addi %0, %arg1 : i32
    %c0_i32 = arith.constant 0 : i32
    %c0_i32_0 = arith.constant 0 : i32
    return %1, %c0_i32 : i32, i32
  }
  func.func @transform_1(%arg0: i32, %arg1: i32) -> (i32, i32) {
    %c1_i32 = arith.constant 1 : i32
    %0 = arith.muli %arg0, %c1_i32 : i32
    %1 = arith.addi %0, %arg1 : i32
    %c0_i32 = arith.constant 0 : i32
    %c0_i32_0 = arith.constant 0 : i32
    return %1, %c0_i32 : i32, i32
  }
  func.func @transform_2(%arg0: i32, %arg1: i32) -> (i32, i32) {
    %c1_i32 = arith.constant 1 : i32
    %0 = arith.muli %arg0, %c1_i32 : i32
    %1 = arith.addi %0, %arg1 : i32
    %c0_i32 = arith.constant 0 : i32
    %c0_i32_0 = arith.constant 0 : i32
    return %1, %c0_i32 : i32, i32
  }
  func.func @transform_3(%arg0: i32, %arg1: i32) -> (i32, i32) {
    %c0_i32 = arith.constant 0 : i32
    %c0_i32_0 = arith.constant 0 : i32
    %c0_i32_1 = arith.constant 0 : i32
    return %c0_i32, %c0_i32_0 : i32, i32
  }
  func.func @transform_4(%arg0: i32, %arg1: i32) -> (i32, i32) {
    %c0_i32 = arith.constant 0 : i32
    %c0_i32_0 = arith.constant 0 : i32
    %c0_i32_1 = arith.constant 0 : i32
    return %c0_i32, %c0_i32_0 : i32, i32
  }
  func.func @transform_5(%arg0: i32, %arg1: i32) -> (i32, i32) {
    %c0_i32 = arith.constant 0 : i32
    %c0_i32_0 = arith.constant 0 : i32
    %c0_i32_1 = arith.constant 0 : i32
    return %c0_i32, %c0_i32_0 : i32, i32
  }
  func.func @transform_6(%arg0: i32, %arg1: i32) -> (i32, i32) {
    %c0_i32 = arith.constant 0 : i32
    %c0_i32_0 = arith.constant 0 : i32
    %c0_i32_1 = arith.constant 0 : i32
    return %c0_i32, %c0_i32_0 : i32, i32
  }
  func.func @transform_7(%arg0: i32, %arg1: i32) -> (i32, i32) {
    %c0_i32 = arith.constant 0 : i32
    %c0_i32_0 = arith.constant 0 : i32
    %c0_i32_1 = arith.constant 0 : i32
    return %c0_i32, %c0_i32_0 : i32, i32
  }
  func.func @transform_8(%arg0: i32, %arg1: i32) -> (i32, i32) {
    %c0_i32 = arith.constant 0 : i32
    %c0_i32_0 = arith.constant 0 : i32
    %c0_i32_1 = arith.constant 0 : i32
    return %c0_i32, %c0_i32_0 : i32, i32
  }
  func.func @transform_9(%arg0: i32, %arg1: i32) -> (i32, i32) {
    %c0_i32 = arith.constant 0 : i32
    %c0_i32_0 = arith.constant 0 : i32
    %c0_i32_1 = arith.constant 0 : i32
    return %c0_i32, %c0_i32_0 : i32, i32
  }
  func.func @transform_10(%arg0: i32, %arg1: i32) -> (i32, i32, i32) {
    %c0_i32 = arith.constant 0 : i32
    %c0_i32_0 = arith.constant 0 : i32
    %c0_i32_1 = arith.constant 0 : i32
    return %arg0, %c0_i32, %c0_i32_0 : i32, i32, i32
  }
  func.func @transform_11(%arg0: i32, %arg1: i32) -> (i32, i32, i32) {
    %c0_i32 = arith.constant 0 : i32
    %c0_i32_0 = arith.constant 0 : i32
    %c0_i32_1 = arith.constant 0 : i32
    return %arg0, %c0_i32, %c0_i32_0 : i32, i32, i32
  }
  func.func @transform_12(%arg0: i32, %arg1: i32) -> (i32, i32, i32) {
    %c0_i32 = arith.constant 0 : i32
    %c0_i32_0 = arith.constant 0 : i32
    %c0_i32_1 = arith.constant 0 : i32
    return %arg0, %c0_i32, %c0_i32_0 : i32, i32, i32
  }
}

</mosaic_0001>

<llo_original>
// kernel: tpu_custom_call.1
$region0: #{tpu_custom_call.1}
  #allocation0 [shape = 'u32[]', space=smem, size = 0x4, offset = 0x4, fixed_abs, tag = 'smem constant byte address 0x4 - core index']
  #allocation1 [shape = 'u32[72,128]{1,0:T(1,128)}', space=vmem, size = 0x9000, scoped, tag = 'internal scratch']
  #allocation2 [shape = 'f32[1,1]{1,0:T(1,128)}', space=vmem, size = 0x200, scoped, tag = 'scratch operand']
  #allocation3 [shape = 'f32[1,1]{1,0:T(1,128)}', space=vmem, size = 0x200, scoped, tag = 'scratch operand']
  #allocation4 [shape = 'f32[1,1]{1,0:T(1,128)}', space=vmem, size = 0x200, scoped, tag = 'scratch operand']
  #allocation5 [shape = 'f32[1,1]{1,0:T(1,128)S(1)}', space=vmem, size = 0x200, scoped, tag = 'scoped memory for tpu_custom_call.1']
  %s0 = inlined_call_operand.hbm [shape: f32[8,16], index: 0, kind: input, shape index: {}]
  %s1 = inlined_call_operand.hbm [shape: f32[8,16], index: 1, kind: input, shape index: {}]
  %s2 = inlined_call_operand.hbm [shape: f32[8,16], index: 2, kind: input, shape index: {}]
  %s3 = inlined_call_operand.hbm [shape: f32[16,128], index: 3, kind: input, shape index: {}]
  %s4 = inlined_call_operand.hbm [shape: f32[16,128], index: 4, kind: input, shape index: {}]
  %s5 = inlined_call_operand.vmem [shape: f32[1,128], index: 5, kind: input, shape index: {}]
  %s6 = inlined_call_operand.hbm [shape: f32[128,128], index: 6, kind: input, shape index: {}]
  %s7 = inlined_call_operand.vmem [shape: f32[1,128], index: 7, kind: input, shape index: {}]
  %s8 = inlined_call_operand.vmem [shape: f32[1,128], index: 8, kind: input, shape index: {}]
  %s9 = inlined_call_operand.<no memory space> [shape: f32[1,1], index: 9, kind: input, shape index: {}]
  %s10 = inlined_call_operand.hbm [shape: f32[1,1,128], index: 10, kind: output, shape index: {0}]
  %s11 = inlined_call_operand.hbm [shape: f32[1,1,128], index: 11, kind: output, shape index: {1}]
  %s12 = inlined_call_operand.hbm [shape: f32[1,1,128], index: 12, kind: output, shape index: {2}]
  %13 = xla_tuple %s10, %s11, %s12
  %s14 = sld [smem:[#allocation0]]
  $region98: #{tpu_custom_call.1} parent=0
    _
  %s16 = ssub.s32 1, %s14
  %s17 = scalar_select 0, %s16, %s14
  %v18 = vstv %s9
  %19 = vst [vmem:[#allocation5] sm:$0x1] %v18
  $region1: #{tpu_custom_call.1} parent=0
    #allocation6 [shape = 'u8[4096]{0}', space=vmem, size = 0x1000, scoped, tag = 'input window, operand 0, single buffered']
    #allocation7 [shape = 's32[1]{0}', space=sflag, size = 0x4, scoped, tag = 'scoped memory for tpu_custom_call.1']
    #allocation8 [shape = 's32[1]{0}', space=sflag, size = 0x4, scoped, tag = 'scoped memory for tpu_custom_call.1']
    #allocation9 [shape = 'u8[4096]{0}', space=vmem, size = 0x1000, scoped, tag = 'input window, operand 1, single buffered']
    #allocation10 [shape = 's32[1]{0}', space=sflag, size = 0x4, scoped, tag = 'scoped memory for tpu_custom_call.1']
    #allocation11 [shape = 'u8[4096]{0}', space=vmem, size = 0x1000, scoped, tag = 'input window, operand 2, single buffered']
    #allocation12 [shape = 'u8[8192]{0}', space=vmem, size = 0x2000, scoped, tag = 'input window, operand 3, single buffered']
    #allocation13 [shape = 's32[1]{0}', space=sflag, size = 0x4, scoped, tag = 'scoped memory for tpu_custom_call.1']
    #allocation14 [shape = 'u8[8192]{0}', space=vmem, size = 0x2000, scoped, tag = 'input window, operand 4, single buffered']
    #allocation15 [shape = 'u8[65536]{0}', space=vmem, size = 0x10000, scoped, tag = 'input window, operand 6, single buffered']
    #allocation16 [shape = 's32[1]{0}', space=sflag, size = 0x4, scoped, tag = 'scoped memory for tpu_custom_call.1']
    #allocation17 [shape = 'u8[512]{0}', space=vmem, size = 0x400, scoped, tag = 'output window, operand 0, single buffered']
    #allocation18 [shape = 'u8[512]{0}', space=vmem, size = 0x400, scoped, tag = 'output window, operand 1, single buffered']
    #allocation19 [shape = 's32[1]{0}', space=sflag, size = 0x4, scoped, tag = 'scoped memory for tpu_custom_call.1']
    #allocation20 [shape = 'u8[512]{0}', space=vmem, size = 0x400, scoped, tag = 'output window, operand 2, single buffered']
    %20 = vsyncpa [#allocation7], 0
    %21 = vsyncpa [#allocation10], 0
    %22 = vsyncpa [#allocation13], 0
    %23 = vsyncpa [#allocation16], 0
    %24 = vsyncpa [#allocation8], 0
    %25 = vsyncpa [#allocation19], 0
    // Predicated region
    $region2: #{tpu_custom_call.1} parent=1 // pred_check
      _
    $region3: #{tpu_custom_call.1} parent=1 // pred_check_branch
      %27 = sbr.rel (0) target = $region5
    $region4: #{tpu_custom_call.1} parent=1 // pred_region
      %s28 = sadd.s32 0, 0
      %30 = vsyncadd [#allocation7], 0
      %s31 = smul.addr %s28, 8
      %s32 = scalar_lea.hbm %s0, %s31
      %s34 = sshll.u32 %s32, 4
      %s35 = int_to_ptr.hbm [resolvable:$true] %s34
      %s36 = sshll.u32 [#allocation6], 4
      %s37 = int_to_ptr.vmem [resolvable:$true] %s36
      %39 = dma.hbm_to_vmem [thread:$0]  %s35, 128, %s37, [#allocation7]
    $region5: #{tpu_custom_call.1} parent=1 // pred_fallthru
      _
    // Predicated region
    $region6: #{tpu_custom_call.1} parent=1 // pred_check
      _
    $region7: #{tpu_custom_call.1} parent=1 // pred_check_branch
      %41 = sbr.rel (0) target = $region9
    $region8: #{tpu_custom_call.1} parent=1 // pred_region
      %s42 = sadd.s32 0, 0
      %44 = vsyncadd [#allocation10], 0
      %s45 = smul.addr %s42, 8
      %s46 = scalar_lea.hbm %s1, %s45
      %s48 = sshll.u32 %s46, 4
      %s49 = int_to_ptr.hbm [resolvable:$true] %s48
      %s50 = sshll.u32 [#allocation9], 4
      %s51 = int_to_ptr.vmem [resolvable:$true] %s50
      %53 = dma.hbm_to_vmem [thread:$0]  %s49, 128, %s51, [#allocation10]
    $region9: #{tpu_custom_call.1} parent=1 // pred_fallthru
      _
    // Predicated region
    $region10: #{tpu_custom_call.1} parent=1 // pred_check
      _
    $region11: #{tpu_custom_call.1} parent=1 // pred_check_branch
      %55 = sbr.rel (0) target = $region13
    $region12: #{tpu_custom_call.1} parent=1 // pred_region
      %s56 = sadd.s32 0, 0
      %58 = vsyncadd [#allocation10], 0
      %s59 = smul.addr %s56, 8
      %s60 = scalar_lea.hbm %s2, %s59
      %s62 = sshll.u32 %s60, 4
      %s63 = int_to_ptr.hbm [resolvable:$true] %s62
      %s64 = sshll.u32 [#allocation11], 4
      %s65 = int_to_ptr.vmem [resolvable:$true] %s64
      %67 = dma.hbm_to_vmem [thread:$0]  %s63, 128, %s65, [#allocation10]
    $region13: #{tpu_custom_call.1} parent=1 // pred_fallthru
      _
    // Predicated region
    $region14: #{tpu_custom_call.1} parent=1 // pred_check
      _
    $region15: #{tpu_custom_call.1} parent=1 // pred_check_branch
      %69 = sbr.rel (0) target = $region17
    $region16: #{tpu_custom_call.1} parent=1 // pred_region
      %71 = vsyncadd [#allocation13], 0
      %s72 = sshll.u32 %s3, 4
      %s73 = int_to_ptr.hbm [resolvable:$true] %s72
      %s74 = sshll.u32 [#allocation12], 4
      %s75 = int_to_ptr.vmem [resolvable:$true] %s74
      %80 = dma.hbm_to_vmem [thread:$0]  %s73, 256, %s75, [#allocation13], 128, 128, 8
    $region17: #{tpu_custom_call.1} parent=1 // pred_fallthru
      _
    // Predicated region
    $region18: #{tpu_custom_call.1} parent=1 // pred_check
      _
    $region19: #{tpu_custom_call.1} parent=1 // pred_check_branch
      %82 = sbr.rel (0) target = $region21
    $region20: #{tpu_custom_call.1} parent=1 // pred_region
      %84 = vsyncadd [#allocation13], 0
      %s85 = sshll.u32 %s4, 4
      %s86 = int_to_ptr.hbm [resolvable:$true] %s85
      %s87 = sshll.u32 [#allocation14], 4
      %s88 = int_to_ptr.vmem [resolvable:$true] %s87
      %93 = dma.hbm_to_vmem [thread:$0]  %s86, 256, %s88, [#allocation13], 128, 128, 8
    $region21: #{tpu_custom_call.1} parent=1 // pred_fallthru
      _
    // Predicated region
    $region22: #{tpu_custom_call.1} parent=1 // pred_check
      _
    $region23: #{tpu_custom_call.1} parent=1 // pred_check_branch
      %95 = sbr.rel (0) target = $region25
    $region24: #{tpu_custom_call.1} parent=1 // pred_region
      _
    $region25: #{tpu_custom_call.1} parent=1 // pred_fallthru
      _
    // Predicated region
    $region26: #{tpu_custom_call.1} parent=1 // pred_check
      _
    $region27: #{tpu_custom_call.1} parent=1 // pred_check_branch
      %97 = sbr.rel (0) target = $region29
    $region28: #{tpu_custom_call.1} parent=1 // pred_region
      %99 = vsyncadd [#allocation16], 0
      %s100 = sshll.u32 %s6, 4
      %s101 = int_to_ptr.hbm [resolvable:$true] %s100
      %s102 = sshll.u32 [#allocation15], 4
      %s103 = int_to_ptr.vmem [resolvable:$true] %s102
      %108 = dma.hbm_to_vmem [thread:$0]  %s101, 2048, %s103, [#allocation16], 128, 128, 8
    $region29: #{tpu_custom_call.1} parent=1 // pred_fallthru
      _
    // Predicated region
    $region30: #{tpu_custom_call.1} parent=1 // pred_check
      _
    $region31: #{tpu_custom_call.1} parent=1 // pred_check_branch
      %110 = sbr.rel (0) target = $region33
    $region32: #{tpu_custom_call.1} parent=1 // pred_region
      _
    $region33: #{tpu_custom_call.1} parent=1 // pred_fallthru
      _
    // Predicated region
    $region34: #{tpu_custom_call.1} parent=1 // pred_check
      _
    $region35: #{tpu_custom_call.1} parent=1 // pred_check_branch
      %112 = sbr.rel (0) target = $region37
    $region36: #{tpu_custom_call.1} parent=1 // pred_region
      _
    $region37: #{tpu_custom_call.1} parent=1 // pred_fallthru
      _
    // Predicated region
    $region38: #{tpu_custom_call.1} parent=1 // pred_check
      _
    $region39: #{tpu_custom_call.1} parent=1 // pred_check_branch
      %114 = sbr.rel (0) target = $region41
    $region40: #{tpu_custom_call.1} parent=1 // pred_region
      _
    $region41: #{tpu_custom_call.1} parent=1 // pred_fallthru
      _
    // Predicated region
    $region42: #{tpu_custom_call.1} parent=1 // pred_check
      _
    $region43: #{tpu_custom_call.1} parent=1 // pred_check_branch
      %116 = sbr.rel (0) target = $region45
    $region44: #{tpu_custom_call.1} parent=1 // pred_region
      %118 = dma.done [#allocation7], 128
    $region45: #{tpu_custom_call.1} parent=1 // pred_fallthru
      _
    // Predicated region
    $region46: #{tpu_custom_call.1} parent=1 // pred_check
      _
    $region47: #{tpu_custom_call.1} parent=1 // pred_check_branch
      %120 = sbr.rel (0) target = $region49
    $region48: #{tpu_custom_call.1} parent=1 // pred_region
      %122 = dma.done [#allocation10], 128
    $region49: #{tpu_custom_call.1} parent=1 // pred_fallthru
      _
    // Predicated region
    $region50: #{tpu_custom_call.1} parent=1 // pred_check
      _
    $region51: #{tpu_custom_call.1} parent=1 // pred_check_branch
      %124 = sbr.rel (0) target = $region53
    $region52: #{tpu_custom_call.1} parent=1 // pred_region
      %126 = dma.done [#allocation10], 128
    $region53: #{tpu_custom_call.1} parent=1 // pred_fallthru
      _
    // Predicated region
    $region54: #{tpu_custom_call.1} parent=1 // pred_check
      _
    $region55: #{tpu_custom_call.1} parent=1 // pred_check_branch
      %128 = sbr.rel (0) target = $region57
    $region56: #{tpu_custom_call.1} parent=1 // pred_region
      %130 = dma.done [#allocation13], 256
    $region57: #{tpu_custom_call.1} parent=1 // pred_fallthru
      _
    // Predicated region
    $region58: #{tpu_custom_call.1} parent=1 // pred_check
      _
    $region59: #{tpu_custom_call.1} parent=1 // pred_check_branch
      %132 = sbr.rel (0) target = $region61
    $region60: #{tpu_custom_call.1} parent=1 // pred_region
      %134 = dma.done [#allocation13], 256
    $region61: #{tpu_custom_call.1} parent=1 // pred_fallthru
      _
    // Predicated region
    $region62: #{tpu_custom_call.1} parent=1 // pred_check
      _
    $region63: #{tpu_custom_call.1} parent=1 // pred_check_branch
      %136 = sbr.rel (0) target = $region65
    $region64: #{tpu_custom_call.1} parent=1 // pred_region
      %138 = dma.done [#allocation16], 2048
    $region65: #{tpu_custom_call.1} parent=1 // pred_fallthru
      _
    %s139 = sadd.s32 0, 0
    %s140 = sadd.s32 0, 0
    %s141 = sadd.s32 0, 0
    %p142 = scmp.eq.s32.totalorder 0, 0
    // Predicated region
    $region66: #{tpu_custom_call.1} parent=1 // pred_check
      %p143 = pneg %p142
    $region67: #{tpu_custom_call.1} parent=1 // pred_check_branch
      %145 = sbr.rel (%p143) target = $region69
    $region68: #{tpu_custom_call.1} parent=1 // pred_region
      %vm146 = vcmask 0
      %147 = vst.msk [vmem:[#allocation2] sm:$0x1] %vm146, 0.0
      %148 = vst.msk [vmem:[#allocation3] sm:$0x1] %vm146, -inf
      %149 = vst.msk [vmem:[#allocation4] sm:$0x1] %vm146, 0.0
    $region69: #{tpu_custom_call.1} parent=1 // pred_fallthru
      _
    %v150 = vld [vmem:[#allocation12] sm:$0xff]
    %v151 = vld [vmem:[#allocation12 + $0x8] sm:$0xff]
    %v152 = vld [vmem:[#allocation14] sm:$0xff]
    %v153 = vld [vmem:[#allocation14 + $0x8] sm:$0xff]
    %v154 = vld [vmem:[%s5] sm:$0x1]
    %v155 = vld [vmem:[#allocation15] sm:$0xff]
    %v156 = vld [vmem:[#allocation15 + $0x8] sm:$0xff]
    %v157 = vld [vmem:[#allocation15 + $0x10] sm:$0xff]
    %v158 = vld [vmem:[#allocation15 + $0x18] sm:$0xff]
    %v159 = vld [vmem:[#allocation15 + $0x20] sm:$0xff]
    %v160 = vld [vmem:[#allocation15 + $0x28] sm:$0xff]
    %v161 = vld [vmem:[#allocation15 + $0x30] sm:$0xff]
    %v162 = vld [vmem:[#allocation15 + $0x38] sm:$0xff]
    %v163 = vld [vmem:[#allocation15 + $0x40] sm:$0xff]
    %v164 = vld [vmem:[#allocation15 + $0x48] sm:$0xff]
    %v165 = vld [vmem:[#allocation15 + $0x50] sm:$0xff]
    %v166 = vld [vmem:[#allocation15 + $0x58] sm:$0xff]
    %v167 = vld [vmem:[#allocation15 + $0x60] sm:$0xff]
    %v168 = vld [vmem:[#allocation15 + $0x68] sm:$0xff]
    %v169 = vld [vmem:[#allocation15 + $0x70] sm:$0xff]
    %v170 = vld [vmem:[#allocation15 + $0x78] sm:$0xff]
    %v171 = vld [vmem:[%s7] sm:$0x1]
    %v172 = vld [vmem:[%s8] sm:$0x1]
    %v173 = vld [vmem:[#allocation5] sm:$0x1]
    %v174 = vld [vmem:[#allocation6] sm:$0xff]
    %v175 = vld [vmem:[#allocation9] sm:$0xff]
    %v176 = vld [vmem:[#allocation11] sm:$0xff]
    %v178 = vperm.slane %v154, 0
    %vm180 = vcmask 130048
    %v182 = vsel %vm180, %v174, 0
    %184 = vmatpush.msra.mxu0 0.0
    %185 = vmatpush.msra.mxu0 0.0
    %186 = vmatpush.msra.mxu0 0.0
    %187 = vmatpush.msra.mxu0 0.0
    %188 = vmatpush.msra.mxu0 0.0
    %189 = vmatpush.msra.mxu0 0.0
    %190 = vmatpush.msra.mxu0 0.0
    %191 = vmatpush.msra.mxu0 0.0
    %192 = vmatpush.msra.mxu0 0.0
    %193 = vmatpush.msra.mxu0 0.0
    %194 = vmatpush.msra.mxu0 0.0
    %195 = vmatpush.msra.mxu0 0.0
    %196 = vmatpush.msra.mxu0 0.0
    %197 = vmatpush.msra.mxu0 0.0
    %198 = vmatpush.msra.mxu0 %v151
    %199 = vmatpush.msra.mxu0 %v150
    %200 = vmatmul.f32.gmra.mxu0 %v182
    %v201 = vpop.f32.mrf.mxu0
    %v202 = vadd.f32 %v178, %v201
    %203 = vdwg.mxu0
    %v205 = vsel %vm180, %v175, 0
    %207 = vmatpush.msra.mxu0 0.0
    %208 = vmatpush.msra.mxu0 0.0
    %209 = vmatpush.msra.mxu0 0.0
    %210 = vmatpush.msra.mxu0 0.0
    %211 = vmatpush.msra.mxu0 0.0
    %212 = vmatpush.msra.mxu0 0.0
    %213 = vmatpush.msra.mxu0 0.0
    %214 = vmatpush.msra.mxu0 0.0
    %215 = vmatpush.msra.mxu0 0.0
    %216 = vmatpush.msra.mxu0 0.0
    %217 = vmatpush.msra.mxu0 0.0
    %218 = vmatpush.msra.mxu0 0.0
    %219 = vmatpush.msra.mxu0 0.0
    %220 = vmatpush.msra.mxu0 0.0
    %221 = vmatpush.msra.mxu0 %v153
    %222 = vmatpush.msra.mxu0 %v152
    %223 = vmatmul.f32.gmra.mxu0 %v205
    %v224 = vpop.f32.mrf.mxu0
    %v225 = vadd.f32 0.0, %v224
    %226 = vdwg.mxu0
    %v228 = vsel %vm180, %v176, 0
    %230 = vmatpush.msra.mxu0 0.0
    %231 = vmatpush.msra.mxu0 0.0
    %232 = vmatpush.msra.mxu0 0.0
    %233 = vmatpush.msra.mxu0 0.0
    %234 = vmatpush.msra.mxu0 0.0
    %235 = vmatpush.msra.mxu0 0.0
    %236 = vmatpush.msra.mxu0 0.0
    %237 = vmatpush.msra.mxu0 0.0
    %238 = vmatpush.msra.mxu0 0.0
    %239 = vmatpush.msra.mxu0 0.0
    %240 = vmatpush.msra.mxu0 0.0
    %241 = vmatpush.msra.mxu0 0.0
    %242 = vmatpush.msra.mxu0 0.0
    %243 = vmatpush.msra.mxu0 0.0
    %244 = vmatpush.msra.mxu0 %v153
    %245 = vmatpush.msra.mxu0 %v152
    %246 = vmatmul.f32.gmra.mxu0 %v228
    %v247 = vpop.f32.mrf.mxu0
    %v248 = vadd.f32 0.0, %v247
    %249 = vdwg.mxu0
    %v250 = vadd.f32 %v202, %v225
    %v251 = vmax.f32 %v250, 0.0
    %v252 = vadd.f32 %v202, %v248
    %v253 = vmax.f32 %v252, 0.0
    %v255 = vperm.slane %v171, 0
    %257 = vmatpush.msra.mxu0 %v170
    %258 = vmatpush.msra.mxu0 %v169
    %259 = vmatpush.msra.mxu0 %v168
    %260 = vmatpush.msra.mxu0 %v167
    %261 = vmatpush.msra.mxu0 %v166
    %262 = vmatpush.msra.mxu0 %v165
    %263 = vmatpush.msra.mxu0 %v164
    %264 = vmatpush.msra.mxu0 %v163
    %265 = vmatpush.msra.mxu0 %v162
    %266 = vmatpush.msra.mxu0 %v161
    %267 = vmatpush.msra.mxu0 %v160
    %268 = vmatpush.msra.mxu0 %v159
    %269 = vmatpush.msra.mxu0 %v158
    %270 = vmatpush.msra.mxu0 %v157
    %271 = vmatpush.msra.mxu0 %v156
    %272 = vmatpush.msra.mxu0 %v155
    %273 = vmatmul.f32.gmra.mxu0 %v251
    %v274 = vpop.f32.mrf.mxu0
    %v275 = vadd.f32 %v255, %v274
    %276 = vdwg.mxu0
    %v277 = vmax.f32 %v275, 0.0
    %278 = vmatpush.msra.mxu0 %v170
    %279 = vmatpush.msra.mxu0 %v169
    %280 = vmatpush.msra.mxu0 %v168
    %281 = vmatpush.msra.mxu0 %v167
    %282 = vmatpush.msra.mxu0 %v166
    %283 = vmatpush.msra.mxu0 %v165
    %284 = vmatpush.msra.mxu0 %v164
    %285 = vmatpush.msra.mxu0 %v163
    %286 = vmatpush.msra.mxu0 %v162
    %287 = vmatpush.msra.mxu0 %v161
    %288 = vmatpush.msra.mxu0 %v160
    %289 = vmatpush.msra.mxu0 %v159
    %290 = vmatpush.msra.mxu0 %v158
    %291 = vmatpush.msra.mxu0 %v157
    %292 = vmatpush.msra.mxu0 %v156
    %293 = vmatpush.msra.mxu0 %v155
    %294 = vmatmul.f32.gmra.mxu0 %v253
    %v295 = vpop.f32.mrf.mxu0
    %v296 = vadd.f32 %v255, %v295
    %297 = vdwg.mxu0
    %v298 = vmax.f32 %v296, 0.0
    %s299 = sadd.s32 0, 0
    %s300 = smul.u32 %s299, 8
    %v301 = vlaneseq
    %v302 = vshrl.u32 %v301, 7
    %v303 = vstv %s300
    %v304 = vadd.s32 %v303, %v302
    %vm305 = vcmp.lt.s32.totalorder %v304, 8
    %v306 = vsel %vm305, 1, 0
    %v307 = vcvt.s32.f32 %v306
    %vm308 = vcmask 7168
    %v309 = vsel %vm308, %v307, 0.0
    %310 = vadd.xlane.f32.xlu0 %v309
    %v311 = vpop.xlane.xlu0 %310
    %v312 = vrot.slane %v311, 4
    %v313 = vadd.f32 %v311, %v312
    %v314 = vrot.slane %v313, 2
    %v315 = vadd.f32 %v313, %v314
    %v316 = vrot.slane %v315, 1
    %v317 = vadd.f32 %v315, %v316
    %s318 = vtos %v317
    %vm319 = vcmp.eq.s32.totalorder %v306, 1
    %v320 = vsel %vm319, %v277, 0.0
    %v321 = vrot.slane %v320, 4
    %v322 = vadd.f32 %v320, %v321
    %v323 = vrot.slane %v322, 2
    %v324 = vadd.f32 %v322, %v323
    %v325 = vrot.slane %v324, 1
    %v326 = vadd.f32 %v324, %v325
    %v327 = vld [vmem:[#allocation2] sm:$0x1]
    %v328 = vmul.f32 %v326, %v172
    %vm329 = vcmask 1040384
    %v330 = vsel %vm329, %v328, 0.0
    %331 = vadd.xlane.f32.xlu0 %v330
    %v332 = vpop.xlane.xlu0 %331
    %v333 = vstv %s318
    %v334 = vmul.f32 %v333, %v173
    %v335 = vadd.f32 %v332, %v334
    %v336 = vadd.f32 %v327, %v335
    %vm337 = vcmask 0
    %338 = vst.msk [vmem:[#allocation2] sm:$0x1] %vm337, %v336
    %v340 = vperm.slane %v172, 0
    %v342 = vmul.f32 %v298, %v340
    %343 = vadd.xlane.f32.xlu0 %v342
    %v344 = vpop.xlane.xlu0 %343
    %v346 = vperm.slane %v173, 0
    %v348 = vadd.f32 %v344, %v346
    %v349 = vld [vmem:[#allocation3] sm:$0x1]
    %v350 = vsel %vm305, %v348, -inf
    %v351 = vsel %vm308, %v350, -inf
    %v352 = vrot.slane %v351, 4
    %v353 = vmax.f32 %v351, %v352
    %v354 = vrot.slane %v353, 2
    %v355 = vmax.f32 %v353, %v354
    %v356 = vrot.slane %v355, 1
    %v357 = vmax.f32 %v355, %v356
    %v358 = vmax.f32 %v349, %v357
    %vm359 = vcmp.eq.f32.partialorder %v358, -inf
    %v360 = vsub.f32 %v349, %v358
    %v361 = vmul.f32 %v360, 1.442695
    %v362 = vpow.pop %v361
    %v363 = vsel %vm359, 0.0, %v362
    %v365 = vperm.slane %v358, 0
    %v367 = vsub.f32 %v348, %v365
    %v368 = vmul.f32 %v367, 1.442695
    %v369 = vpow.pop %v368
    %v370 = vsel %vm305, %v369, 0.0
    %v371 = vld [vmem:[#allocation4] sm:$0x1]
    %v372 = vmul.f32 %v371, %v363
    %v373 = vsel %vm308, %v370, 0.0
    %v374 = vrot.slane %v373, 4
    %v375 = vadd.f32 %v373, %v374
    %v376 = vrot.slane %v375, 2
    %v377 = vadd.f32 %v375, %v376
    %v378 = vrot.slane %v377, 1
    %v379 = vadd.f32 %v377, %v378
    %v380 = vadd.f32 %v372, %v379
    %381 = vst.msk [vmem:[#allocation4] sm:$0x1] %vm337, %v380
    %382 = vst.msk [vmem:[#allocation3] sm:$0x1] %vm337, %v358
    // Predicated region
    $region70: #{tpu_custom_call.1} parent=1 // pred_check
      %p383 = pneg %p142
    $region71: #{tpu_custom_call.1} parent=1 // pred_check_branch
      %385 = sbr.rel (%p383) target = $region73
    $region72: #{tpu_custom_call.1} parent=1 // pred_region
      %v386 = vld [vmem:[#allocation2] sm:$0x1]
      %388 = vset.pattern.permute.xlu0 0
      %389 = vperm.xlu0 %388, %v386
      %v390 = vpop.permute.xlu0 %389
      %v392 = vperm.slane %v390, 0
      %393 = vst [vmem:[#allocation17] sm:$0x1] %v392
      %v394 = vld [vmem:[#allocation3] sm:$0x1]
      %396 = vset.pattern.permute.xlu0 0
      %397 = vperm.xlu0 %396, %v394
      %v398 = vpop.permute.xlu0 %397
      %v400 = vperm.slane %v398, 0
      %401 = vst [vmem:[#allocation18] sm:$0x1] %v400
      %v402 = vld [vmem:[#allocation4] sm:$0x1]
      %404 = vset.pattern.permute.xlu0 0
      %405 = vperm.xlu0 %404, %v402
      %v406 = vpop.permute.xlu0 %405
      %v408 = vperm.slane %v406, 0
      %409 = vst [vmem:[#allocation20] sm:$0x1] %v408
    $region73: #{tpu_custom_call.1} parent=1 // pred_fallthru
      _
    // Predicated region
    $region74: #{tpu_custom_call.1} parent=1 // pred_check
      _
    $region75: #{tpu_custom_call.1} parent=1 // pred_check_branch
      %411 = sbr.rel (0) target = $region77
    $region76: #{tpu_custom_call.1} parent=1 // pred_region
      %413 = vsyncadd [#allocation8], 0
      %s415 = sshll.u32 [#allocation17], 4
      %s416 = int_to_ptr.vmem [resolvable:$true] %s415
      %s417 = sshll.u32 %s10, 4
      %s418 = int_to_ptr.hbm [resolvable:$true] %s417
      %420 = dma.vmem_to_hbm [thread:$0]  %s416, 16, %s418, [#allocation8]
    $region77: #{tpu_custom_call.1} parent=1 // pred_fallthru
      _
    // Predicated region
    $region78: #{tpu_custom_call.1} parent=1 // pred_check
      _
    $region79: #{tpu_custom_call.1} parent=1 // pred_check_branch
      %422 = sbr.rel (0) target = $region81
    $region80: #{tpu_custom_call.1} parent=1 // pred_region
      %424 = vsyncadd [#allocation19], 0
      %s426 = sshll.u32 [#allocation18], 4
      %s427 = int_to_ptr.vmem [resolvable:$true] %s426
      %s428 = sshll.u32 %s11, 4
      %s429 = int_to_ptr.hbm [resolvable:$true] %s428
      %431 = dma.vmem_to_hbm [thread:$0]  %s427, 16, %s429, [#allocation19]
    $region81: #{tpu_custom_call.1} parent=1 // pred_fallthru
      _
    // Predicated region
    $region82: #{tpu_custom_call.1} parent=1 // pred_check
      _
    $region83: #{tpu_custom_call.1} parent=1 // pred_check_branch
      %433 = sbr.rel (0) target = $region85
    $region84: #{tpu_custom_call.1} parent=1 // pred_region
      %435 = vsyncadd [#allocation19], 0
      %s437 = sshll.u32 [#allocation20], 4
      %s438 = int_to_ptr.vmem [resolvable:$true] %s437
      %s439 = sshll.u32 %s12, 4
      %s440 = int_to_ptr.hbm [resolvable:$true] %s439
      %442 = dma.vmem_to_hbm [thread:$0]  %s438, 16, %s440, [#allocation19]
    $region85: #{tpu_custom_call.1} parent=1 // pred_fallthru
      _
    // Predicated region
    $region86: #{tpu_custom_call.1} parent=1 // pred_check
      _
    $region87: #{tpu_custom_call.1} parent=1 // pred_check_branch
      %444 = sbr.rel (0) target = $region89
    $region88: #{tpu_custom_call.1} parent=1 // pred_region
      %446 = dma.done [#allocation8], 16
    $region89: #{tpu_custom_call.1} parent=1 // pred_fallthru
      _
    // Predicated region
    $region90: #{tpu_custom_call.1} parent=1 // pred_check
      _
    $region91: #{tpu_custom_call.1} parent=1 // pred_check_branch
      %448 = sbr.rel (0) target = $region93
    $region92: #{tpu_custom_call.1} parent=1 // pred_region
      %450 = dma.done [#allocation19], 16
    $region93: #{tpu_custom_call.1} parent=1 // pred_fallthru
      _
    // Predicated region
    $region94: #{tpu_custom_call.1} parent=1 // pred_check
      _
    $region95: #{tpu_custom_call.1} parent=1 // pred_check_branch
      %452 = sbr.rel (0) target = $region97
    $region96: #{tpu_custom_call.1} parent=1 // pred_region
      %454 = dma.done [#allocation19], 16
    $region97: #{tpu_custom_call.1} parent=1 // pred_fallthru
      _
    %455 = vsyncpa [#allocation7], 1
    %456 = vsyncpa [#allocation10], 1
    %457 = vsyncpa [#allocation13], 1
    %458 = vsyncpa [#allocation16], 1
    %459 = vsyncpa [#allocation8], 1
    %460 = vsyncpa [#allocation19], 1

</llo_original>
